<compile_context>
chip_gen: v6e
topology: v6e:2x2x1
jax: 0.10.0
libtpu: 0.0.40
codegen_flags: <defaults>
</compile_context>

<pallas_src>
import math
import functools

import jax
import jax.numpy as jnp
from jax.experimental import pallas as pl
from jax.experimental.pallas import tpu as pltpu


# ----------------------------------------------------------------------------
# helpers
# ----------------------------------------------------------------------------
def _round_up(x, m):
    return ((x + m - 1) // m) * m


def _pick_tile(dim, candidates):
    """Largest candidate tile that evenly divides dim, else the full dim."""
    for c in candidates:
        if c <= dim and dim % c == 0:
            return c
    return dim


def _vmem_limit_bytes(desired=64 * 1024 * 1024):
    """Raise the scoped-VMEM cap where the part has headroom (v5e/v6e have
    128 MiB physical); stay conservative on smaller parts (v7x: 64 MiB)."""
    try:
        phys = int(pltpu.get_tpu_info().vmem_capacity_bytes)
        return max(16 * 1024 * 1024, min(desired, (phys * 3) // 4))
    except Exception:
        return 32 * 1024 * 1024


# ----------------------------------------------------------------------------
# Fused QKV projection: tiled  y = x @ W + b  (bf16 operands, f32 accumulate)
# ----------------------------------------------------------------------------
def _linear_bias_kernel(x_ref, w_ref, b_ref, o_ref, acc_ref):
    k = pl.program_id(2)

    @pl.when(k == 0)
    def _():
        acc_ref[...] = jnp.zeros_like(acc_ref)

    acc_ref[...] += jnp.dot(x_ref[...], w_ref[...],
                            preferred_element_type=jnp.float32)

    # Bias add only once, in the epilogue of the K reduction.
    @pl.when(k == pl.num_programs(2) - 1)
    def _():
        o_ref[...] = (acc_ref[...] + b_ref[...].astype(jnp.float32)
                      ).astype(o_ref.dtype)


def linear_bias(x2d, weight, bias, *, out_dtype, tm_desired=256):
    """x2d: [M, K]; weight: [K, N]; bias: [N]  ->  [M, N] = x2d @ weight + bias."""
    M, K = x2d.shape
    N = weight.shape[1]

    # MXU-friendly row tile: multiple of 128, padded so the grid divides.
    tm = min(tm_desired, _round_up(M, 128))
    Mp = _round_up(M, tm)
    if Mp != M:
        x2d = jnp.pad(x2d, ((0, Mp - M), (0, 0)))

    tn = _pick_tile(N, (512, 256, 128))
    tk = _pick_tile(K, (512, 256, 128))

    b2d = bias.reshape(1, N).astype(jnp.float32)
    in_item = jnp.dtype(x2d.dtype).itemsize
    out_item = jnp.dtype(out_dtype).itemsize

    out = pl.pallas_call(
        _linear_bias_kernel,
        out_shape=jax.ShapeDtypeStruct((Mp, N), out_dtype),
        grid_spec=pltpu.PrefetchScalarGridSpec(
            num_scalar_prefetch=0,
            grid=(Mp // tm, N // tn, K // tk),
            in_specs=[
                pl.BlockSpec((tm, tk), lambda i, j, k: (i, k)),   # x tile
                pl.BlockSpec((tk, tn), lambda i, j, k: (k, j)),   # weight tile (streamed)
                pl.BlockSpec((1, tn), lambda i, j, k: (0, j)),    # bias row
            ],
            out_specs=pl.BlockSpec((tm, tn), lambda i, j, k: (i, j)),
            scratch_shapes=[pltpu.VMEM((tm, tn), jnp.float32)],   # resident accumulator
        ),
        compiler_params=pltpu.CompilerParams(
            dimension_semantics=("parallel", "parallel", "arbitrary"),
            vmem_limit_bytes=_vmem_limit_bytes(),
        ),
        cost_estimate=pl.CostEstimate(
            flops=2 * Mp * K * N,
            transcendentals=0,
            bytes_accessed=(Mp * K + K * N) * in_item + Mp * N * out_item,
        ),
    )(x2d, weight, b2d)

    return out[:M] if Mp != M else out


# ----------------------------------------------------------------------------
# Flash-style multi-head attention (online softmax, additive finite mask)
# ----------------------------------------------------------------------------
def _flash_attn_kernel(q_ref, kt_ref, v_ref, mask_ref, o_ref,
                       m_sc, l_sc, acc_sc, *, scale):
    kv = pl.program_id(2)

    @pl.when(kv == 0)
    def _():
        m_sc[...] = jnp.full(m_sc.shape, -jnp.inf, jnp.float32)
        l_sc[...] = jnp.zeros_like(l_sc)
        acc_sc[...] = jnp.zeros_like(acc_sc)

    # Pre-scale q (tq*d multiplies) instead of scaling the score matrix
    # (tq*tkv multiplies).  Stays in bf16 for the MXU.
    q = q_ref[0] * scale                                         # (tq, d)
    kt = kt_ref[0]                                               # (d, tkv)
    s = jnp.dot(q, kt, preferred_element_type=jnp.float32)       # (tq, tkv) f32
    s = s + mask_ref[0].astype(jnp.float32)                      # (1, tkv) broadcast

    # Online softmax update (f32).
    # TODO(synk): on v6e/v7x the exp could optionally run in bf16 (EUP ~2x);
    # kept f32 for portability/accuracy (v5e EUP has no bf16).
    m_prev = m_sc[...]
    m_new = jnp.maximum(m_prev, s.max(axis=-1, keepdims=True))
    alpha = jnp.exp(m_prev - m_new)
    p = jnp.exp(s - m_new)
    l_sc[...] = alpha * l_sc[...] + p.sum(axis=-1, keepdims=True)
    acc_sc[...] = alpha * acc_sc[...] + jnp.dot(
        p.astype(v_ref.dtype), v_ref[0], preferred_element_type=jnp.float32)
    m_sc[...] = m_new

    # TODO(synk): attention-probs dropout is identity here (eval mode); a
    # training-mode version would use pltpu.prng_seed / prng_random_bits.
    @pl.when(kv == pl.num_programs(2) - 1)
    def _():
        inv_l = pl.reciprocal(l_sc[...], approx=True)            # EUP slot
        o_ref[0] = (acc_sc[...] * inv_l).astype(o_ref.dtype)


def multihead_attention(q, k_t, v, mask, *, scale, num_heads, out_dtype):
    """q/v: [B*heads, S, d]; k_t: [B*heads, d, S]; mask: [B, 1, S] additive
    (finite values).  Returns [B*heads, S, d] in out_dtype."""
    BH, S, d = q.shape
    # Larger q tiles cut K/V re-streaming; bounded so tq*tkv f32 score/p
    # intermediates (+ double-buffered K/V) stay well inside v7x's 64 MiB VMEM.
    tq = _pick_tile(S, (512, 256, 128))
    tkv = _pick_tile(S, (512, 256, 128))
    in_item = jnp.dtype(q.dtype).itemsize
    out_item = jnp.dtype(out_dtype).itemsize
    n_qtiles = S // tq

    kernel = functools.partial(_flash_attn_kernel, scale=scale)

    return pl.pallas_call(
        kernel,
        out_shape=jax.ShapeDtypeStruct((BH, S, d), out_dtype),
        grid_spec=pltpu.PrefetchScalarGridSpec(
            num_scalar_prefetch=0,
            grid=(BH, S // tq, S // tkv),
            in_specs=[
                pl.BlockSpec((1, tq, d), lambda b, qi, ki: (b, qi, 0)),     # q
                pl.BlockSpec((1, d, tkv), lambda b, qi, ki: (b, 0, ki)),    # k^T (lane-dense)
                pl.BlockSpec((1, tkv, d), lambda b, qi, ki: (b, ki, 0)),    # v
                # mask read straight from [B,1,S]; no per-head broadcast in HBM
                pl.BlockSpec((1, 1, tkv),
                             lambda b, qi, ki: (b // num_heads, 0, ki)),
            ],
            out_specs=pl.BlockSpec((1, tq, d), lambda b, qi, ki: (b, qi, 0)),
            scratch_shapes=[
                pltpu.VMEM((tq, 1), jnp.float32),   # running max
                pltpu.VMEM((tq, 1), jnp.float32),   # running denom
                pltpu.VMEM((tq, d), jnp.float32),   # output accumulator
            ],
        ),
        compiler_params=pltpu.CompilerParams(
            dimension_semantics=("parallel", "parallel", "arbitrary"),
            vmem_limit_bytes=_vmem_limit_bytes(),
        ),
        cost_estimate=pl.CostEstimate(
            flops=4 * BH * S * S * d,
            transcendentals=BH * S * S,
            # q read + o write once, K/V re-streamed once per q tile.
            bytes_accessed=(BH * S * d * (in_item + out_item)
                            + 2 * BH * S * d * in_item * n_qtiles),
        ),
    )(q, k_t, v, mask)


# ----------------------------------------------------------------------------
# Full SelfAttention forward
# ----------------------------------------------------------------------------
def self_attention(hidden_states, wq, bq, wk, bk, wv, bv, attention_mask,
                   *, num_heads):
    """hidden_states: [B, S, H]; w*: [H, H] (already [in, out]); b*: [H];
    attention_mask: [B, 1, 1, S] additive (finite). Returns [B, S, H]."""
    B, S, H = hidden_states.shape
    assert H % num_heads == 0
    d = H // num_heads
    M = B * S
    out_dtype = hidden_states.dtype

    # Fused QKV projection in bf16 (f32 accumulation inside the kernel):
    # one wide matmul feeds the MXU at full bf16 rate and halves HBM reads.
    w_qkv = jnp.concatenate([wq, wk, wv], axis=1).astype(jnp.bfloat16)   # [H, 3H]
    b_qkv = jnp.concatenate([bq, bk, bv], axis=0)                        # [3H]
    x_bf16 = hidden_states.reshape(M, H).astype(jnp.bfloat16)
    qkv = linear_bias(x_bf16, w_qkv, b_qkv, out_dtype=jnp.bfloat16)      # [M, 3H] bf16

    # TODO(synk): for head_dim < 128, grouping heads per attention grid step
    # (lane-dense blocks) and writing the context directly into [B,S,H]
    # layout would remove the remaining wrapper transposes; kept head-major
    # [B*heads, S, d] here so every BlockSpec keeps full/aligned minor dims.
    def head_major(x2d):
        return (x2d.reshape(B, S, num_heads, d)
                .transpose(0, 2, 1, 3)
                .reshape(B * num_heads, S, d))

    q = head_major(qkv[:, 0 * H:1 * H])
    v = head_major(qkv[:, 2 * H:3 * H])
    # K is produced pre-transposed ([B*heads, d, S]) at the same transpose
    # cost, so q·kᵀ in the kernel is a plain lane-dense matmul.
    k_t = (qkv[:, 1 * H:2 * H].reshape(B, S, num_heads, d)
           .transpose(0, 2, 3, 1)
           .reshape(B * num_heads, d, S))

    mask = attention_mask.reshape(B, 1, S).astype(jnp.float32)

    ctx = multihead_attention(q, k_t, v, mask, scale=1.0 / math.sqrt(d),
                              num_heads=num_heads, out_dtype=out_dtype)

    return (ctx.reshape(B, num_heads, S, d)
            .transpose(0, 2, 1, 3)
            .reshape(B, S, H))


# ----------------------------------------------------------------------------
# Pure-JAX f32 reference (matches the PyTorch module in eval mode)
# ----------------------------------------------------------------------------
def _reference(hidden_states, wq, bq, wk, bk, wv, bv, attention_mask, num_heads):
    B, S, H = hidden_states.shape
    d = H // num_heads

    def proj(w, b):
        y = jnp.einsum("bsh,ho->bso", hidden_states, w) + b
        return y.reshape(B, S, num_heads, d).transpose(0, 2, 1, 3)

    q, k, v = proj(wq, bq), proj(wk, bk), proj(wv, bv)
    scores = jnp.einsum("bhqd,bhkd->bhqk", q, k) / math.sqrt(d)
    scores = scores + attention_mask
    probs = jax.nn.softmax(scores, axis=-1)
    ctx = jnp.einsum("bhqk,bhkd->bhqd", probs, v)
    return ctx.transpose(0, 2, 1, 3).reshape(B, S, H)


if __name__ == "__main__":
    # Small config: hidden_size=32, num_heads=4 (head_dim=8), batch=2, seq=8
    B, S, H, num_heads = 2, 8, 32, 4

    key = jax.random.PRNGKey(0)
    kx, kq, kk, kv_, kbq, kbk, kbv = jax.random.split(key, 7)

    hidden_states = jax.random.normal(kx, (B, S, H), dtype=jnp.float32)

    bound = 1.0 / math.sqrt(H)

    def u(k_, shape):
        return jax.random.uniform(k_, shape, jnp.float32, -bound, bound)

    wq, wk, wv = u(kq, (H, H)), u(kk, (H, H)), u(kv_, (H, H))
    bq, bk, bv = u(kbq, (H,)), u(kbk, (H,)), u(kbv, (H,))

    # Additive attention mask (BERT convention): 0 = keep, -1e9 = mask out.
    mask = jnp.zeros((B, 1, 1, S), dtype=jnp.float32)
    mask = mask.at[1, 0, 0, S - 2:].set(-1e9)

    out = self_attention(hidden_states, wq, bq, wk, bk, wv, bv, mask,
                         num_heads=num_heads)
    out = jax.block_until_ready(out)

    ref = _reference(hidden_states, wq, bq, wk, bk, wv, bv, mask, num_heads)
    assert out.shape == (B, S, H)
    # bf16 MXU operands + approx reciprocal -> relaxed tolerance vs f32 ref.
    assert jnp.allclose(out, ref, atol=3e-2, rtol=3e-2), "mismatch vs reference"

    print("KERNEL_OK")
</pallas_src>

<mosaic_0001>
module attributes {stable_mosaic.version = 11 : i64} {
  func.func @_linear_bias_kernel(%arg0: i32, %arg1: i32, %arg2: i32, %arg3: memref<128x32xbf16, #tpu.memory_space<vmem>>, %arg4: memref<32x96xbf16, #tpu.memory_space<vmem>>, %arg5: memref<1x96xf32, #tpu.memory_space<vmem>>, %arg6: memref<128x96xbf16, #tpu.memory_space<vmem>>, %arg7: memref<128x96xf32, #tpu.memory_space<vmem>>) attributes {dimension_semantics = [#tpu.dimension_semantics<parallel>, #tpu.dimension_semantics<parallel>, #tpu.dimension_semantics<arbitrary>], iteration_bounds = array<i64: 1, 1, 1>, scalar_prefetch = 0 : i64, scratch_operands = 1 : i64, tpu.core_type = #tpu.core_type<tc>, window_params = [{transform_indices = @transform_0, window_bounds = array<i64: 128, 32>}, {transform_indices = @transform_1, window_bounds = array<i64: 32, 96>}, {transform_indices = @transform_2, window_bounds = array<i64: 1, 96>}, {transform_indices = @transform_3, window_bounds = array<i64: 128, 96>}]} {
    %c0_i32 = arith.constant 0 : i32
    %0 = arith.cmpi eq, %arg2, %c0_i32 : i32
    %1 = arith.extui %0 : i1 to i32
    %c0_i32_0 = arith.constant 0 : i32
    %2 = arith.cmpi ne, %1, %c0_i32_0 : i32
    scf.if %2 {
      %cst_10 = arith.constant 0.000000e+00 : f32
      %12 = vector.broadcast %cst_10 : f32 to vector<128x96xf32>
      %c0_11 = arith.constant 0 : index
      %c0_12 = arith.constant 0 : index
      %13 = vector.load %arg7[%c0_11, %c0_12] : memref<128x96xf32, #tpu.memory_space<vmem>>, vector<128x96xf32>
      tpu.vector_store %arg7[%c0_11, %c0_12], %12 {strides = array<i32>} : memref<128x96xf32, #tpu.memory_space<vmem>>, vector<128x96xf32>,
    } else {
    }
    %c0 = arith.constant 0 : index
    %c0_1 = arith.constant 0 : index
    %3 = vector.load %arg7[%c0, %c0_1] : memref<128x96xf32, #tpu.memory_space<vmem>>, vector<128x96xf32>
    %c0_2 = arith.constant 0 : index
    %c0_3 = arith.constant 0 : index
    %4 = vector.load %arg3[%c0_2, %c0_3] : memref<128x32xbf16, #tpu.memory_space<vmem>>, vector<128x32xbf16>
    %c0_4 = arith.constant 0 : index
    %c0_5 = arith.constant 0 : index
    %5 = vector.load %arg4[%c0_4, %c0_5] : memref<32x96xbf16, #tpu.memory_space<vmem>>, vector<32x96xbf16>
    %cst = arith.constant dense<0.000000e+00> : vector<128x96xf32>
    %6 = tpu.matmul %4, %5, %cst {dimension_numbers = #tpu.dot_dimension_numbers<[1], [0], [0], [1], [0, 0, 1, 1], [], []>} : vector<128x32xbf16>, vector<32x96xbf16>, vector<128x96xf32> -> vector<128x96xf32>
    %7 = arith.addf %3, %6 : vector<128x96xf32>
    %c0_6 = arith.constant 0 : index
    %c0_7 = arith.constant 0 : index
    %8 = vector.load %arg7[%c0_6, %c0_7] : memref<128x96xf32, #tpu.memory_space<vmem>>, vector<128x96xf32>
    tpu.vector_store %arg7[%c0_6, %c0_7], %7 {strides = array<i32>} : memref<128x96xf32, #tpu.memory_space<vmem>>, vector<128x96xf32>,
    %c0_i32_8 = arith.constant 0 : i32
    %9 = arith.cmpi eq, %arg2, %c0_i32_8 : i32
    %10 = arith.extui %9 : i1 to i32
    %c0_i32_9 = arith.constant 0 : i32
    %11 = arith.cmpi ne, %10, %c0_i32_9 : i32
    scf.if %11 {
      %c0_10 = arith.constant 0 : index
      %c0_11 = arith.constant 0 : index
      %12 = vector.load %arg7[%c0_10, %c0_11] : memref<128x96xf32, #tpu.memory_space<vmem>>, vector<128x96xf32>
      %c0_12 = arith.constant 0 : index
      %c0_13 = arith.constant 0 : index
      %13 = vector.load %arg5[%c0_12, %c0_13] : memref<1x96xf32, #tpu.memory_space<vmem>>, vector<1x96xf32>
      %14 = vector.broadcast %13 : vector<1x96xf32> to vector<128x96xf32>
      %15 = arith.addf %12, %14 : vector<128x96xf32>
      %16 = arith.truncf %15 : vector<128x96xf32> to vector<128x96xbf16>
      %c0_14 = arith.constant 0 : index
      %c0_15 = arith.constant 0 : index
      %17 = vector.load %arg6[%c0_14, %c0_15] : memref<128x96xbf16, #tpu.memory_space<vmem>>, vector<128x96xbf16>
      tpu.vector_store %arg6[%c0_14, %c0_15], %16 {strides = array<i32>} : memref<128x96xbf16, #tpu.memory_space<vmem>>, vector<128x96xbf16>,
    } else {
    }
    return
  }
  func.func @transform_0(%arg0: i32, %arg1: i32, %arg2: i32) -> (i32, i32) {
    %c0_i32 = arith.constant 0 : i32
    return %arg0, %arg2 : i32, i32
  }
  func.func @transform_1(%arg0: i32, %arg1: i32, %arg2: i32) -> (i32, i32) {
    %c0_i32 = arith.constant 0 : i32
    return %arg2, %arg1 : i32, i32
  }
  func.func @transform_2(%arg0: i32, %arg1: i32, %arg2: i32) -> (i32, i32) {
    %c0_i32 = arith.constant 0 : i32
    %c0_i32_0 = arith.constant 0 : i32
    return %c0_i32, %arg1 : i32, i32
  }
  func.func @transform_3(%arg0: i32, %arg1: i32, %arg2: i32) -> (i32, i32) {
    %c0_i32 = arith.constant 0 : i32
    return %arg0, %arg1 : i32, i32
  }
}

</mosaic_0001>

<llo_original>
// kernel: tpu_custom_call.1
$region0: #{tpu_custom_call.1}
  #allocation0 [shape = 'u32[]', space=smem, size = 0x4, offset = 0x4, fixed_abs, tag = 'smem constant byte address 0x4 - core index']
  #allocation1 [shape = 'u32[144,128]{1,0:T(1,128)}', space=vmem, size = 0x12000, scoped, tag = 'internal scratch']
  #allocation2 [shape = 'f32[128,96]{1,0:T(8,128)}', space=vmem, size = 0x10000, scoped, tag = 'scratch operand']
  %s0 = inlined_call_operand.vmem [shape: bf16[128,32], index: 0, kind: input, shape index: {}]
  %s1 = inlined_call_operand.vmem [shape: bf16[32,96], index: 1, kind: input, shape index: {}]
  %s2 = inlined_call_operand.vmem [shape: f32[1,96], index: 2, kind: input, shape index: {}]
  %s3 = inlined_call_operand.vmem [shape: bf16[128,96], index: 3, kind: output, shape index: {}]
  %s4 = sld [smem:[#allocation0]]
  $region30: #{tpu_custom_call.1} parent=0
    _
  %s6 = ssub.s32 1, %s4
  %s7 = scalar_select 0, %s6, %s4
  // Predicated region
  $region2: #{tpu_custom_call.1} parent=0 // pred_check
    _
  $region3: #{tpu_custom_call.1} parent=0 // pred_check_branch
    %9 = sbr.rel (0) target = $region5
  $region4: #{tpu_custom_call.1} parent=0 // pred_region
    _
  $region5: #{tpu_custom_call.1} parent=0 // pred_fallthru
    _
  // Predicated region
  $region6: #{tpu_custom_call.1} parent=0 // pred_check
    _
  $region7: #{tpu_custom_call.1} parent=0 // pred_check_branch
    %11 = sbr.rel (0) target = $region9
  $region8: #{tpu_custom_call.1} parent=0 // pred_region
    _
  $region9: #{tpu_custom_call.1} parent=0 // pred_fallthru
    _
  // Predicated region
  $region10: #{tpu_custom_call.1} parent=0 // pred_check
    _
  $region11: #{tpu_custom_call.1} parent=0 // pred_check_branch
    %13 = sbr.rel (0) target = $region13
  $region12: #{tpu_custom_call.1} parent=0 // pred_region
    _
  $region13: #{tpu_custom_call.1} parent=0 // pred_fallthru
    _
  %p15 = scmp.eq.s32.totalorder 0, 0
  // Predicated region
  $region14: #{tpu_custom_call.1} parent=0 // pred_check
    %p16 = pneg %p15
  $region15: #{tpu_custom_call.1} parent=0 // pred_check_branch
    %18 = sbr.rel (%p16) target = $region17
  $region16: #{tpu_custom_call.1} parent=0 // pred_region
    %vm19 = vcmask 785408
    %20 = vst.msk [vmem:[#allocation2] sm:$0xff] %vm19, 0.0
    %21 = vst.msk [vmem:[#allocation2 + $0x8] sm:$0xff] %vm19, 0.0
    %22 = vst.msk [vmem:[#allocation2 + $0x10] sm:$0xff] %vm19, 0.0
    %23 = vst.msk [vmem:[#allocation2 + $0x18] sm:$0xff] %vm19, 0.0
    %24 = vst.msk [vmem:[#allocation2 + $0x20] sm:$0xff] %vm19, 0.0
    %25 = vst.msk [vmem:[#allocation2 + $0x28] sm:$0xff] %vm19, 0.0
    %26 = vst.msk [vmem:[#allocation2 + $0x30] sm:$0xff] %vm19, 0.0
    %27 = vst.msk [vmem:[#allocation2 + $0x38] sm:$0xff] %vm19, 0.0
    %28 = vst.msk [vmem:[#allocation2 + $0x40] sm:$0xff] %vm19, 0.0
    %29 = vst.msk [vmem:[#allocation2 + $0x48] sm:$0xff] %vm19, 0.0
    %30 = vst.msk [vmem:[#allocation2 + $0x50] sm:$0xff] %vm19, 0.0
    %31 = vst.msk [vmem:[#allocation2 + $0x58] sm:$0xff] %vm19, 0.0
    %32 = vst.msk [vmem:[#allocation2 + $0x60] sm:$0xff] %vm19, 0.0
    %33 = vst.msk [vmem:[#allocation2 + $0x68] sm:$0xff] %vm19, 0.0
    %34 = vst.msk [vmem:[#allocation2 + $0x70] sm:$0xff] %vm19, 0.0
    %35 = vst.msk [vmem:[#allocation2 + $0x78] sm:$0xff] %vm19, 0.0
  $region17: #{tpu_custom_call.1} parent=0 // pred_fallthru
    _
  %v36 = vld [vmem:[#allocation2] sm:$0xff]
  %v37 = vld [vmem:[#allocation2 + $0x8] sm:$0xff]
  %v38 = vld [vmem:[#allocation2 + $0x10] sm:$0xff]
  %v39 = vld [vmem:[#allocation2 + $0x18] sm:$0xff]
  %v40 = vld [vmem:[#allocation2 + $0x20] sm:$0xff]
  %v41 = vld [vmem:[#allocation2 + $0x28] sm:$0xff]
  %v42 = vld [vmem:[#allocation2 + $0x30] sm:$0xff]
  %v43 = vld [vmem:[#allocation2 + $0x38] sm:$0xff]
  %v44 = vld [vmem:[#allocation2 + $0x40] sm:$0xff]
  %v45 = vld [vmem:[#allocation2 + $0x48] sm:$0xff]
  %v46 = vld [vmem:[#allocation2 + $0x50] sm:$0xff]
  %v47 = vld [vmem:[#allocation2 + $0x58] sm:$0xff]
  %v48 = vld [vmem:[#allocation2 + $0x60] sm:$0xff]
  %v49 = vld [vmem:[#allocation2 + $0x68] sm:$0xff]
  %v50 = vld [vmem:[#allocation2 + $0x70] sm:$0xff]
  %v51 = vld [vmem:[#allocation2 + $0x78] sm:$0xff]
  %v52 = vld [vmem:[%s0] sm:$0xf]
  %v53 = vld [vmem:[%s0 + $0x4] sm:$0xf]
  %v54 = vld [vmem:[%s0 + $0x8] sm:$0xf]
  %v55 = vld [vmem:[%s0 + $0xc] sm:$0xf]
  %v56 = vld [vmem:[%s0 + $0x10] sm:$0xf]
  %v57 = vld [vmem:[%s0 + $0x14] sm:$0xf]
  %v58 = vld [vmem:[%s0 + $0x18] sm:$0xf]
  %v59 = vld [vmem:[%s0 + $0x1c] sm:$0xf]
  %v60 = vld [vmem:[%s0 + $0x20] sm:$0xf]
  %v61 = vld [vmem:[%s0 + $0x24] sm:$0xf]
  %v62 = vld [vmem:[%s0 + $0x28] sm:$0xf]
  %v63 = vld [vmem:[%s0 + $0x2c] sm:$0xf]
  %v64 = vld [vmem:[%s0 + $0x30] sm:$0xf]
  %v65 = vld [vmem:[%s0 + $0x34] sm:$0xf]
  %v66 = vld [vmem:[%s0 + $0x38] sm:$0xf]
  %v67 = vld [vmem:[%s0 + $0x3c] sm:$0xf]
  %v68 = vld [vmem:[%s1] sm:$0xf]
  %v69 = vld [vmem:[%s1 + $0x4] sm:$0xf]
  %v70 = vld [vmem:[%s1 + $0x8] sm:$0xf]
  %v71 = vld [vmem:[%s1 + $0xc] sm:$0xf]
  %v88 = vunpack.c.l.b16 %v52
  %v89 = vunpack.c.l.b16 %v53
  %v90 = vunpack.c.l.b16 %v54
  %v91 = vunpack.c.l.b16 %v55
  %v92 = vunpack.c.l.b16 %v56
  %v93 = vunpack.c.l.b16 %v57
  %v94 = vunpack.c.l.b16 %v58
  %v95 = vunpack.c.l.b16 %v59
  %v96 = vunpack.c.l.b16 %v60
  %v97 = vunpack.c.l.b16 %v61
  %v98 = vunpack.c.l.b16 %v62
  %v99 = vunpack.c.l.b16 %v63
  %v100 = vunpack.c.l.b16 %v64
  %v101 = vunpack.c.l.b16 %v65
  %v102 = vunpack.c.l.b16 %v66
  %v103 = vunpack.c.l.b16 %v67
  %v104 = vpack.c.b16 %v89, %v88
  %v105 = vpack.c.b16 %v91, %v90
  %v106 = vpack.c.b16 %v93, %v92
  %v107 = vpack.c.b16 %v95, %v94
  %v108 = vpack.c.b16 %v97, %v96
  %v109 = vpack.c.b16 %v99, %v98
  %v110 = vpack.c.b16 %v101, %v100
  %v111 = vpack.c.b16 %v103, %v102
  %v116 = vunpack.c.l.b16 %v68
  %v117 = vunpack.c.l.b16 %v69
  %v118 = vunpack.c.l.b16 %v70
  %v119 = vunpack.c.l.b16 %v71
  %v120 = vpack.c.b16 %v117, %v116
  %v121 = vpack.c.b16 %v119, %v118
  %vm124 = vcmask 261120
  %v126 = vsel %vm124, %v104, 0
  %v129 = vsel %vm124, %v105, 0
  %v132 = vsel %vm124, %v106, 0
  %v135 = vsel %vm124, %v107, 0
  %v138 = vsel %vm124, %v108, 0
  %v141 = vsel %vm124, %v109, 0
  %v144 = vsel %vm124, %v110, 0
  %v147 = vsel %vm124, %v111, 0
  %149 = vmatprep.subr.bf16.mxu0 0
  %150 = vmatpush1.bf16.msra.mxu0 0
  %151 = vmatprep.subr.bf16.mxu0 0
  %152 = vmatpush1.bf16.msra.mxu0 0
  %153 = vmatprep.subr.bf16.mxu0 0
  %154 = vmatpush1.bf16.msra.mxu0 0
  %155 = vmatprep.subr.bf16.mxu0 0
  %156 = vmatpush1.bf16.msra.mxu0 0
  %157 = vmatprep.subr.bf16.mxu0 0
  %158 = vmatpush1.bf16.msra.mxu0 0
  %159 = vmatprep.subr.bf16.mxu0 0
  %160 = vmatpush1.bf16.msra.mxu0 0
  %161 = vmatprep.subr.bf16.mxu0 0
  %162 = vmatpush1.bf16.msra.mxu0 %v121
  %163 = vmatprep.subr.bf16.mxu0 0
  %164 = vmatpush1.bf16.msra.mxu0 %v120
  %165 = vmatprep.subr.bf16.mxu0 0
  %166 = vmatpush2.bf16.msra.mxu0 0
  %167 = vmatprep.subr.bf16.mxu0 0
  %168 = vmatpush2.bf16.msra.mxu0 0
  %169 = vmatprep.subr.bf16.mxu0 0
  %170 = vmatpush2.bf16.msra.mxu0 0
  %171 = vmatprep.subr.bf16.mxu0 0
  %172 = vmatpush2.bf16.msra.mxu0 0
  %173 = vmatprep.subr.bf16.mxu0 0
  %174 = vmatpush2.bf16.msra.mxu0 0
  %175 = vmatprep.subr.bf16.mxu0 0
  %176 = vmatpush2.bf16.msra.mxu0 0
  %177 = vmatprep.subr.bf16.mxu0 0
  %178 = vmatpush2.bf16.msra.mxu0 0
  %179 = vmatprep.subr.bf16.mxu0 0
  %180 = vmatpush2.bf16.msra.mxu0 0
  %181 = vmatprep.mubr.bf16.mxu0 0
  %182 = vmatmul.mubr.bf16.gmra.mxu0 %v126
  %v183 = vpop.f32.mrf.mxu0
  %v184 = vadd.f32 0.0, %v183
  %v185 = vpop.f32.mrf.mxu0
  %v186 = vpop.f32.mrf.mxu0
  %v187 = vadd.f32 0.0, %v186
  %v188 = vpop.f32.mrf.mxu0
  %189 = vmatprep.mubr.bf16.mxu0 0
  %190 = vmatmul.mubr.bf16.gmra.mxu0 %v129
  %v191 = vpop.f32.mrf.mxu0
  %v192 = vadd.f32 0.0, %v191
  %v193 = vpop.f32.mrf.mxu0
  %v194 = vpop.f32.mrf.mxu0
  %v195 = vadd.f32 0.0, %v194
  %v196 = vpop.f32.mrf.mxu0
  %197 = vmatprep.mubr.bf16.mxu0 0
  %198 = vmatmul.mubr.bf16.gmra.mxu0 %v132
  %v199 = vpop.f32.mrf.mxu0
  %v200 = vadd.f32 0.0, %v199
  %v201 = vpop.f32.mrf.mxu0
  %v202 = vpop.f32.mrf.mxu0
  %v203 = vadd.f32 0.0, %v202
  %v204 = vpop.f32.mrf.mxu0
  %205 = vmatprep.mubr.bf16.mxu0 0
  %206 = vmatmul.mubr.bf16.gmra.mxu0 %v135
  %v207 = vpop.f32.mrf.mxu0
  %v208 = vadd.f32 0.0, %v207
  %v209 = vpop.f32.mrf.mxu0
  %v210 = vpop.f32.mrf.mxu0
  %v211 = vadd.f32 0.0, %v210
  %v212 = vpop.f32.mrf.mxu0
  %213 = vmatprep.mubr.bf16.mxu0 0
  %214 = vmatmul.mubr.bf16.gmra.mxu0 %v138
  %v215 = vpop.f32.mrf.mxu0
  %v216 = vadd.f32 0.0, %v215
  %v217 = vpop.f32.mrf.mxu0
  %v218 = vpop.f32.mrf.mxu0
  %v219 = vadd.f32 0.0, %v218
  %v220 = vpop.f32.mrf.mxu0
  %221 = vmatprep.mubr.bf16.mxu0 0
  %222 = vmatmul.mubr.bf16.gmra.mxu0 %v141
  %v223 = vpop.f32.mrf.mxu0
  %v224 = vadd.f32 0.0, %v223
  %v225 = vpop.f32.mrf.mxu0
  %v226 = vpop.f32.mrf.mxu0
  %v227 = vadd.f32 0.0, %v226
  %v228 = vpop.f32.mrf.mxu0
  %229 = vmatprep.mubr.bf16.mxu0 0
  %230 = vmatmul.mubr.bf16.gmra.mxu0 %v144
  %v231 = vpop.f32.mrf.mxu0
  %v232 = vadd.f32 0.0, %v231
  %v233 = vpop.f32.mrf.mxu0
  %v234 = vpop.f32.mrf.mxu0
  %v235 = vadd.f32 0.0, %v234
  %v236 = vpop.f32.mrf.mxu0
  %237 = vmatprep.mubr.bf16.mxu0 0
  %238 = vmatmul.mubr.bf16.gmra.mxu0 %v147
  %v239 = vpop.f32.mrf.mxu0
  %v240 = vadd.f32 0.0, %v239
  %v241 = vpop.f32.mrf.mxu0
  %v242 = vpop.f32.mrf.mxu0
  %v243 = vadd.f32 0.0, %v242
  %v244 = vpop.f32.mrf.mxu0
  %245 = vdwg.mxu0
  %v246 = vadd.f32 %v36, %v184
  %v247 = vadd.f32 %v37, %v187
  %v248 = vadd.f32 %v38, %v192
  %v249 = vadd.f32 %v39, %v195
  %v250 = vadd.f32 %v40, %v200
  %v251 = vadd.f32 %v41, %v203
  %v252 = vadd.f32 %v42, %v208
  %v253 = vadd.f32 %v43, %v211
  %v254 = vadd.f32 %v44, %v216
  %v255 = vadd.f32 %v45, %v219
  %v256 = vadd.f32 %v46, %v224
  %v257 = vadd.f32 %v47, %v227
  %v258 = vadd.f32 %v48, %v232
  %v259 = vadd.f32 %v49, %v235
  %v260 = vadd.f32 %v50, %v240
  %v261 = vadd.f32 %v51, %v243
  %vm262 = vcmask 785408
  %263 = vst.msk [vmem:[#allocation2] sm:$0xff] %vm262, %v246
  %264 = vst.msk [vmem:[#allocation2 + $0x8] sm:$0xff] %vm262, %v247
  %265 = vst.msk [vmem:[#allocation2 + $0x10] sm:$0xff] %vm262, %v248
  %266 = vst.msk [vmem:[#allocation2 + $0x18] sm:$0xff] %vm262, %v249
  %267 = vst.msk [vmem:[#allocation2 + $0x20] sm:$0xff] %vm262, %v250
  %268 = vst.msk [vmem:[#allocation2 + $0x28] sm:$0xff] %vm262, %v251
  %269 = vst.msk [vmem:[#allocation2 + $0x30] sm:$0xff] %vm262, %v252
  %270 = vst.msk [vmem:[#allocation2 + $0x38] sm:$0xff] %vm262, %v253
  %271 = vst.msk [vmem:[#allocation2 + $0x40] sm:$0xff] %vm262, %v254
  %272 = vst.msk [vmem:[#allocation2 + $0x48] sm:$0xff] %vm262, %v255
  %273 = vst.msk [vmem:[#allocation2 + $0x50] sm:$0xff] %vm262, %v256
  %274 = vst.msk [vmem:[#allocation2 + $0x58] sm:$0xff] %vm262, %v257
  %275 = vst.msk [vmem:[#allocation2 + $0x60] sm:$0xff] %vm262, %v258
  %276 = vst.msk [vmem:[#allocation2 + $0x68] sm:$0xff] %vm262, %v259
  %277 = vst.msk [vmem:[#allocation2 + $0x70] sm:$0xff] %vm262, %v260
  %278 = vst.msk [vmem:[#allocation2 + $0x78] sm:$0xff] %vm262, %v261
  // Predicated region
  $region18: #{tpu_custom_call.1} parent=0 // pred_check
    %p279 = pneg %p15
  $region19: #{tpu_custom_call.1} parent=0 // pred_check_branch
    %281 = sbr.rel (%p279) target = $region21
  $region20: #{tpu_custom_call.1} parent=0 // pred_region
    %v282 = vld [vmem:[#allocation2] sm:$0xff]
    %v283 = vld [vmem:[#allocation2 + $0x8] sm:$0xff]
    %v284 = vld [vmem:[#allocation2 + $0x10] sm:$0xff]
    %v285 = vld [vmem:[#allocation2 + $0x18] sm:$0xff]
    %v286 = vld [vmem:[#allocation2 + $0x20] sm:$0xff]
    %v287 = vld [vmem:[#allocation2 + $0x28] sm:$0xff]
    %v288 = vld [vmem:[#allocation2 + $0x30] sm:$0xff]
    %v289 = vld [vmem:[#allocation2 + $0x38] sm:$0xff]
    %v290 = vld [vmem:[#allocation2 + $0x40] sm:$0xff]
    %v291 = vld [vmem:[#allocation2 + $0x48] sm:$0xff]
    %v292 = vld [vmem:[#allocation2 + $0x50] sm:$0xff]
    %v293 = vld [vmem:[#allocation2 + $0x58] sm:$0xff]
    %v294 = vld [vmem:[#allocation2 + $0x60] sm:$0xff]
    %v295 = vld [vmem:[#allocation2 + $0x68] sm:$0xff]
    %v296 = vld [vmem:[#allocation2 + $0x70] sm:$0xff]
    %v297 = vld [vmem:[#allocation2 + $0x78] sm:$0xff]
    %v298 = vld [vmem:[%s2] sm:$0x1]
    %v300 = vlaneseq
    %v301 = vshrl.u32 %v300, 7
    %v302 = vsub.s32 0, %v301
    %v303 = vrot.slane %v298, %v302
    %v305 = vadd.f32 %v282, %v303
    %v306 = vadd.f32 %v283, %v303
    %v307 = vadd.f32 %v284, %v303
    %v308 = vadd.f32 %v285, %v303
    %v309 = vadd.f32 %v286, %v303
    %v310 = vadd.f32 %v287, %v303
    %v311 = vadd.f32 %v288, %v303
    %v312 = vadd.f32 %v289, %v303
    %v313 = vadd.f32 %v290, %v303
    %v314 = vadd.f32 %v291, %v303
    %v315 = vadd.f32 %v292, %v303
    %v316 = vadd.f32 %v293, %v303
    %v317 = vadd.f32 %v294, %v303
    %v318 = vadd.f32 %v295, %v303
    %v319 = vadd.f32 %v296, %v303
    %v320 = vadd.f32 %v297, %v303
    %v321 = vpack.c.bf16 %v306, %v305
    %v322 = vpack.c.bf16 %v308, %v307
    %v323 = vpack.c.bf16 %v310, %v309
    %v324 = vpack.c.bf16 %v312, %v311
    %v325 = vpack.c.bf16 %v314, %v313
    %v326 = vpack.c.bf16 %v316, %v315
    %v327 = vpack.c.bf16 %v318, %v317
    %v328 = vpack.c.bf16 %v320, %v319
    %v337 = vunpack.c.l.b16 %v321
    %v338 = vunpack.c.h.b16 %v321
    %v339 = vunpack.c.l.b16 %v322
    %v340 = vunpack.c.h.b16 %v322
    %v341 = vunpack.c.l.b16 %v323
    %v342 = vunpack.c.h.b16 %v323
    %v343 = vunpack.c.l.b16 %v324
    %v344 = vunpack.c.h.b16 %v324
    %v345 = vunpack.c.l.b16 %v325
    %v346 = vunpack.c.h.b16 %v325
    %v347 = vunpack.c.l.b16 %v326
    %v348 = vunpack.c.h.b16 %v326
    %v349 = vunpack.c.l.b16 %v327
    %v350 = vunpack.c.h.b16 %v327
    %v351 = vunpack.c.l.b16 %v328
    %v352 = vunpack.c.h.b16 %v328
    %v353 = vpack.c.b16 %v337, %v337
    %v354 = vpack.c.b16 %v338, %v338
    %v355 = vpack.c.b16 %v339, %v339
    %v356 = vpack.c.b16 %v340, %v340
    %v357 = vpack.c.b16 %v341, %v341
    %v358 = vpack.c.b16 %v342, %v342
    %v359 = vpack.c.b16 %v343, %v343
    %v360 = vpack.c.b16 %v344, %v344
    %v361 = vpack.c.b16 %v345, %v345
    %v362 = vpack.c.b16 %v346, %v346
    %v363 = vpack.c.b16 %v347, %v347
    %v364 = vpack.c.b16 %v348, %v348
    %v365 = vpack.c.b16 %v349, %v349
    %v366 = vpack.c.b16 %v350, %v350
    %v367 = vpack.c.b16 %v351, %v351
    %v368 = vpack.c.b16 %v352, %v352
    %vm385 = vcmask 781312
    %386 = vst.msk [vmem:[%s3] sm:$0xf] %vm385, %v353
    %387 = vst.msk [vmem:[%s3 + $0x4] sm:$0xf] %vm385, %v354
    %388 = vst.msk [vmem:[%s3 + $0x8] sm:$0xf] %vm385, %v355
    %389 = vst.msk [vmem:[%s3 + $0xc] sm:$0xf] %vm385, %v356
    %390 = vst.msk [vmem:[%s3 + $0x10] sm:$0xf] %vm385, %v357
    %391 = vst.msk [vmem:[%s3 + $0x14] sm:$0xf] %vm385, %v358
    %392 = vst.msk [vmem:[%s3 + $0x18] sm:$0xf] %vm385, %v359
    %393 = vst.msk [vmem:[%s3 + $0x1c] sm:$0xf] %vm385, %v360
    %394 = vst.msk [vmem:[%s3 + $0x20] sm:$0xf] %vm385, %v361
    %395 = vst.msk [vmem:[%s3 + $0x24] sm:$0xf] %vm385, %v362
    %396 = vst.msk [vmem:[%s3 + $0x28] sm:$0xf] %vm385, %v363
    %397 = vst.msk [vmem:[%s3 + $0x2c] sm:$0xf] %vm385, %v364
    %398 = vst.msk [vmem:[%s3 + $0x30] sm:$0xf] %vm385, %v365
    %399 = vst.msk [vmem:[%s3 + $0x34] sm:$0xf] %vm385, %v366
    %400 = vst.msk [vmem:[%s3 + $0x38] sm:$0xf] %vm385, %v367
    %401 = vst.msk [vmem:[%s3 + $0x3c] sm:$0xf] %vm385, %v368
  $region21: #{tpu_custom_call.1} parent=0 // pred_fallthru
    _
  // Predicated region
  $region22: #{tpu_custom_call.1} parent=0 // pred_check
    _
  $region23: #{tpu_custom_call.1} parent=0 // pred_check_branch
    %403 = sbr.rel (0) target = $region25
  $region24: #{tpu_custom_call.1} parent=0 // pred_region
    _
  $region25: #{tpu_custom_call.1} parent=0 // pred_fallthru
    _
  // Predicated region
  $region26: #{tpu_custom_call.1} parent=0 // pred_check
    _
  $region27: #{tpu_custom_call.1} parent=0 // pred_check_branch
    %405 = sbr.rel (0) target = $region29
  $region28: #{tpu_custom_call.1} parent=0 // pred_region
    _
  $region29: #{tpu_custom_call.1} parent=0 // pred_fallthru
    _

</llo_original>
